<compile_context>
chip_gen: v7x
topology: tpu7x:2x2x1
jax: 0.10.0
libtpu: 0.0.40
codegen_flags: <defaults>
</compile_context>

<pallas_src>
import jax
import jax.numpy as jnp
from jax.experimental import pallas as pl
from jax.experimental.pallas import tpu as pltpu

D_IN = 3
H1 = 512
H2 = 256
D_OUT = 7
D_OUT_PAD = 128  # lane-dense padded output width


def _round_up(n, m):
    return ((n + m - 1) // m) * m


def _mlp_kernel(x_ref, w1_ref, b1_ref, w2_ref, b2_ref, w3_ref, b3_ref, o_ref):
    # ---- Layer 1: (TB, 3) x (3, 512) done on the VPU (K=3 would waste the MXU)
    x = x_ref[...]            # (TB, 3)   f32
    w1 = w1_ref[...]          # (3, 512)  f32
    h1 = (x[:, 0:1] * w1[0:1, :]
          + x[:, 1:2] * w1[1:2, :]
          + x[:, 2:3] * w1[2:3, :]
          + b1_ref[...])
    h1 = jnp.maximum(h1, 0.0)                              # f32 (TB, 512)

    # ---- Layer 2: MXU, bf16 inputs, f32 accumulation, f32 bias/ReLU
    h2 = jnp.dot(h1.astype(jnp.bfloat16), w2_ref[...],
                 preferred_element_type=jnp.float32)       # (TB, 256)
    h2 = jnp.maximum(h2 + b2_ref[...], 0.0)

    # ---- Layer 3: MXU, lane-dense padded output (TB, 128)
    out = jnp.dot(h2.astype(jnp.bfloat16), w3_ref[...],
                  preferred_element_type=jnp.float32)      # (TB, 128)
    o_ref[...] = (out + b3_ref[...]).astype(o_ref.dtype)


def generator_forward(x, params, *, tb=512):
    """Fused 3-layer MLP forward.  x: (B, 3) float32 -> (B, 7) float32."""
    w1, b1, w2, b2, w3, b3 = params
    B = x.shape[0]

    # MXU layers take bf16 weights; pad layer 3 to 128 lane-dense output cols.
    w2b = w2.astype(jnp.bfloat16)
    w3p = jnp.zeros((H2, D_OUT_PAD), jnp.bfloat16).at[:, :D_OUT].set(
        w3.astype(jnp.bfloat16))
    b3p = jnp.zeros((1, D_OUT_PAD), jnp.float32).at[:, :D_OUT].set(b3)

    # Batch tiling: TB rows/step (multiple of 8); pad B up to a multiple of TB.
    tb_eff = min(tb, _round_up(B, 8))
    bp = _round_up(B, tb_eff)
    if bp != B:
        x = jnp.pad(x, ((0, bp - B), (0, 0)))
    grid = (bp // tb_eff,)

    flops = 2 * bp * (D_IN * H1 + H1 * H2 + H2 * D_OUT_PAD)
    bytes_accessed = (
        bp * D_IN * 4                       # x
        + D_IN * H1 * 4 + H1 * 4            # w1, b1 (f32)
        + H1 * H2 * 2 + H2 * 4              # w2 (bf16), b2
        + H2 * D_OUT_PAD * 2 + D_OUT_PAD * 4  # w3 (bf16, padded), b3
        + bp * D_OUT_PAD * 4                # output
    )

    resident = lambda i: (0, 0)   # weights/biases: same block every step

    out = pl.pallas_call(
        _mlp_kernel,
        out_shape=jax.ShapeDtypeStruct((bp, D_OUT_PAD), jnp.float32),
        grid=grid,
        in_specs=[
            pl.BlockSpec((tb_eff, D_IN), lambda i: (i, 0)),   # x
            pl.BlockSpec((D_IN, H1), resident),               # w1
            pl.BlockSpec((1, H1), resident),                  # b1
            pl.BlockSpec((H1, H2), resident),                 # w2 (bf16)
            pl.BlockSpec((1, H2), resident),                  # b2
            pl.BlockSpec((H2, D_OUT_PAD), resident),          # w3 (bf16, padded)
            pl.BlockSpec((1, D_OUT_PAD), resident),           # b3 (padded)
        ],
        out_specs=pl.BlockSpec((tb_eff, D_OUT_PAD), lambda i: (i, 0)),
        compiler_params=pltpu.CompilerParams(
            dimension_semantics=("parallel",)),
        cost_estimate=pl.CostEstimate(
            flops=flops, transcendentals=0, bytes_accessed=bytes_accessed),
    )(x, w1, b1, w2b, b2, w3p, b3p)

    return out[:B, :D_OUT]


def init_params(key):
    """Deterministic init matching PyTorch nn.Linear default:
    U(-1/sqrt(fan_in), 1/sqrt(fan_in)).  Weights stored as (in, out)."""
    dims = [(D_IN, H1), (H1, H2), (H2, D_OUT)]
    params = []
    for fan_in, fan_out in dims:
        key, kw, kb = jax.random.split(key, 3)
        bound = 1.0 / jnp.sqrt(jnp.float32(fan_in))
        w = jax.random.uniform(kw, (fan_in, fan_out), jnp.float32, -bound, bound)
        b = jax.random.uniform(kb, (1, fan_out), jnp.float32, -bound, bound)
        params += [w, b]
    return tuple(params)


def reference_forward(x, params):
    """Pure-JAX f32 reference for correctness checking."""
    w1, b1, w2, b2, w3, b3 = params
    h1 = jnp.maximum(x @ w1 + b1, 0.0)
    h2 = jnp.maximum(h1 @ w2 + b2, 0.0)
    return h2 @ w3 + b3


if __name__ == "__main__":
    key = jax.random.PRNGKey(0)
    key, kx = jax.random.split(key)

    B = 32  # small demo batch (wrapper pads/tiles arbitrary B)
    x = jax.random.normal(kx, (B, D_IN), jnp.float32)
    params = init_params(key)

    fwd = jax.jit(generator_forward)      # amortize launch overhead at small B
    out = jax.block_until_ready(fwd(x, params))

    ref = reference_forward(x, params)
    assert out.shape == (B, D_OUT), out.shape
    # bf16 MXU inputs (f32 accumulation) -> slightly looser tolerance than pure f32.
    assert jnp.allclose(out, ref, atol=3e-2, rtol=3e-2), "mismatch vs reference"

    print("KERNEL_OK")
</pallas_src>

<mosaic_0001>
module attributes {stable_mosaic.version = 11 : i64} {
  func.func @_mlp_kernel(%arg0: i32, %arg1: memref<32x3xf32, #tpu.memory_space<vmem>>, %arg2: memref<3x512xf32, #tpu.memory_space<vmem>>, %arg3: memref<1x512xf32, #tpu.memory_space<vmem>>, %arg4: memref<512x256xbf16, #tpu.memory_space<vmem>>, %arg5: memref<1x256xf32, #tpu.memory_space<vmem>>, %arg6: memref<256x128xbf16, #tpu.memory_space<vmem>>, %arg7: memref<1x128xf32, #tpu.memory_space<vmem>>, %arg8: memref<32x128xf32, #tpu.memory_space<vmem>>) attributes {dimension_semantics = [#tpu.dimension_semantics<parallel>], iteration_bounds = array<i64: 1>, scalar_prefetch = 0 : i64, scratch_operands = 0 : i64, tpu.core_type = #tpu.core_type<tc>, window_params = [{transform_indices = @transform_0, window_bounds = array<i64: 32, 3>}, {pipeline_mode = #tpu.pipeline_mode<synchronous>, transform_indices = @transform_1, window_bounds = array<i64: 3, 512>}, {pipeline_mode = #tpu.pipeline_mode<synchronous>, transform_indices = @transform_2, window_bounds = array<i64: 1, 512>}, {pipeline_mode = #tpu.pipeline_mode<synchronous>, transform_indices = @transform_3, window_bounds = array<i64: 512, 256>}, {pipeline_mode = #tpu.pipeline_mode<synchronous>, transform_indices = @transform_4, window_bounds = array<i64: 1, 256>}, {pipeline_mode = #tpu.pipeline_mode<synchronous>, transform_indices = @transform_5, window_bounds = array<i64: 256, 128>}, {pipeline_mode = #tpu.pipeline_mode<synchronous>, transform_indices = @transform_6, window_bounds = array<i64: 1, 128>}, {transform_indices = @transform_7, window_bounds = array<i64: 32, 128>}]} {
    %c0 = arith.constant 0 : index
    %c0_0 = arith.constant 0 : index
    %0 = vector.load %arg1[%c0, %c0_0] : memref<32x3xf32, #tpu.memory_space<vmem>>, vector<32x3xf32>
    %c0_1 = arith.constant 0 : index
    %c0_2 = arith.constant 0 : index
    %1 = vector.load %arg2[%c0_1, %c0_2] : memref<3x512xf32, #tpu.memory_space<vmem>>, vector<3x512xf32>
    %2 = vector.extract_strided_slice %0 {offsets = [0, 0], sizes = [32, 1], strides = [1, 1]} : vector<32x3xf32> to vector<32x1xf32>
    %3 = vector.extract_strided_slice %1 {offsets = [0, 0], sizes = [1, 512], strides = [1, 1]} : vector<3x512xf32> to vector<1x512xf32>
    %4 = vector.broadcast %2 : vector<32x1xf32> to vector<32x512xf32>
    %5 = vector.broadcast %3 : vector<1x512xf32> to vector<32x512xf32>
    %6 = arith.mulf %4, %5 : vector<32x512xf32>
    %7 = vector.extract_strided_slice %0 {offsets = [0, 1], sizes = [32, 1], strides = [1, 1]} : vector<32x3xf32> to vector<32x1xf32>
    %8 = vector.extract_strided_slice %1 {offsets = [1, 0], sizes = [1, 512], strides = [1, 1]} : vector<3x512xf32> to vector<1x512xf32>
    %9 = vector.broadcast %7 : vector<32x1xf32> to vector<32x512xf32>
    %10 = vector.broadcast %8 : vector<1x512xf32> to vector<32x512xf32>
    %11 = arith.mulf %9, %10 : vector<32x512xf32>
    %12 = arith.addf %6, %11 : vector<32x512xf32>
    %13 = vector.extract_strided_slice %0 {offsets = [0, 2], sizes = [32, 1], strides = [1, 1]} : vector<32x3xf32> to vector<32x1xf32>
    %14 = vector.extract_strided_slice %1 {offsets = [2, 0], sizes = [1, 512], strides = [1, 1]} : vector<3x512xf32> to vector<1x512xf32>
    %15 = vector.broadcast %13 : vector<32x1xf32> to vector<32x512xf32>
    %16 = vector.broadcast %14 : vector<1x512xf32> to vector<32x512xf32>
    %17 = arith.mulf %15, %16 : vector<32x512xf32>
    %18 = arith.addf %12, %17 : vector<32x512xf32>
    %c0_3 = arith.constant 0 : index
    %c0_4 = arith.constant 0 : index
    %19 = vector.load %arg3[%c0_3, %c0_4] : memref<1x512xf32, #tpu.memory_space<vmem>>, vector<1x512xf32>
    %20 = vector.broadcast %19 : vector<1x512xf32> to vector<32x512xf32>
    %21 = arith.addf %18, %20 : vector<32x512xf32>
    %cst = arith.constant 0.000000e+00 : f32
    %22 = vector.broadcast %cst : f32 to vector<32x512xf32>
    %23 = arith.maximumf %21, %22 : vector<32x512xf32>
    %24 = arith.truncf %23 : vector<32x512xf32> to vector<32x512xbf16>
    %c0_5 = arith.constant 0 : index
    %c0_6 = arith.constant 0 : index
    %25 = vector.load %arg4[%c0_5, %c0_6] : memref<512x256xbf16, #tpu.memory_space<vmem>>, vector<512x256xbf16>
    %cst_7 = arith.constant dense<0.000000e+00> : vector<32x256xf32>
    %26 = tpu.matmul %24, %25, %cst_7 {dimension_numbers = #tpu.dot_dimension_numbers<[1], [0], [0], [1], [0, 0, 1, 1], [], []>} : vector<32x512xbf16>, vector<512x256xbf16>, vector<32x256xf32> -> vector<32x256xf32>
    %c0_8 = arith.constant 0 : index
    %c0_9 = arith.constant 0 : index
    %27 = vector.load %arg5[%c0_8, %c0_9] : memref<1x256xf32, #tpu.memory_space<vmem>>, vector<1x256xf32>
    %28 = vector.broadcast %27 : vector<1x256xf32> to vector<32x256xf32>
    %29 = arith.addf %26, %28 : vector<32x256xf32>
    %cst_10 = arith.constant 0.000000e+00 : f32
    %30 = vector.broadcast %cst_10 : f32 to vector<32x256xf32>
    %31 = arith.maximumf %29, %30 : vector<32x256xf32>
    %32 = arith.truncf %31 : vector<32x256xf32> to vector<32x256xbf16>
    %c0_11 = arith.constant 0 : index
    %c0_12 = arith.constant 0 : index
    %33 = vector.load %arg6[%c0_11, %c0_12] : memref<256x128xbf16, #tpu.memory_space<vmem>>, vector<256x128xbf16>
    %cst_13 = arith.constant dense<0.000000e+00> : vector<32x128xf32>
    %34 = tpu.matmul %32, %33, %cst_13 {dimension_numbers = #tpu.dot_dimension_numbers<[1], [0], [0], [1], [0, 0, 1, 1], [], []>} : vector<32x256xbf16>, vector<256x128xbf16>, vector<32x128xf32> -> vector<32x128xf32>
    %c0_14 = arith.constant 0 : index
    %c0_15 = arith.constant 0 : index
    %35 = vector.load %arg7[%c0_14, %c0_15] : memref<1x128xf32, #tpu.memory_space<vmem>>, vector<1x128xf32>
    %36 = vector.broadcast %35 : vector<1x128xf32> to vector<32x128xf32>
    %37 = arith.addf %34, %36 : vector<32x128xf32>
    %c0_16 = arith.constant 0 : index
    %c0_17 = arith.constant 0 : index
    %38 = vector.load %arg8[%c0_16, %c0_17] : memref<32x128xf32, #tpu.memory_space<vmem>>, vector<32x128xf32>
    tpu.vector_store %arg8[%c0_16, %c0_17], %37 {strides = array<i32>} : memref<32x128xf32, #tpu.memory_space<vmem>>, vector<32x128xf32>,
    return
  }
  func.func @transform_0(%arg0: i32) -> (i32, i32) {
    %c0_i32 = arith.constant 0 : i32
    %c0_i32_0 = arith.constant 0 : i32
    return %arg0, %c0_i32 : i32, i32
  }
  func.func @transform_1(%arg0: i32) -> (i32, i32) {
    %c0_i32 = arith.constant 0 : i32
    %c0_i32_0 = arith.constant 0 : i32
    %c0_i32_1 = arith.constant 0 : i32
    return %c0_i32, %c0_i32_0 : i32, i32
  }
  func.func @transform_2(%arg0: i32) -> (i32, i32) {
    %c0_i32 = arith.constant 0 : i32
    %c0_i32_0 = arith.constant 0 : i32
    %c0_i32_1 = arith.constant 0 : i32
    return %c0_i32, %c0_i32_0 : i32, i32
  }
  func.func @transform_3(%arg0: i32) -> (i32, i32) {
    %c0_i32 = arith.constant 0 : i32
    %c0_i32_0 = arith.constant 0 : i32
    %c0_i32_1 = arith.constant 0 : i32
    return %c0_i32, %c0_i32_0 : i32, i32
  }
  func.func @transform_4(%arg0: i32) -> (i32, i32) {
    %c0_i32 = arith.constant 0 : i32
    %c0_i32_0 = arith.constant 0 : i32
    %c0_i32_1 = arith.constant 0 : i32
    return %c0_i32, %c0_i32_0 : i32, i32
  }
  func.func @transform_5(%arg0: i32) -> (i32, i32) {
    %c0_i32 = arith.constant 0 : i32
    %c0_i32_0 = arith.constant 0 : i32
    %c0_i32_1 = arith.constant 0 : i32
    return %c0_i32, %c0_i32_0 : i32, i32
  }
  func.func @transform_6(%arg0: i32) -> (i32, i32) {
    %c0_i32 = arith.constant 0 : i32
    %c0_i32_0 = arith.constant 0 : i32
    %c0_i32_1 = arith.constant 0 : i32
    return %c0_i32, %c0_i32_0 : i32, i32
  }
  func.func @transform_7(%arg0: i32) -> (i32, i32) {
    %c0_i32 = arith.constant 0 : i32
    %c0_i32_0 = arith.constant 0 : i32
    return %arg0, %c0_i32 : i32, i32
  }
}

</mosaic_0001>

<llo_original>
// kernel: generator_forward.1
$region0: #{generator_forward.1}
  #allocation0 [shape = 'u32[]', space=smem, size = 0x4, offset = 0x4, fixed_abs, tag = 'smem constant byte address 0x4 - core index']
  #allocation1 [shape = 'u32[144,128]{1,0:T(1,128)}', space=vmem, size = 0x12000, scoped, tag = 'internal scratch']
  %s0 = inlined_call_operand.vmem [shape: f32[32,3], index: 0, kind: input, shape index: {}]
  %s1 = inlined_call_operand.vmem [shape: f32[3,512], index: 1, kind: input, shape index: {}]
  %s2 = inlined_call_operand.vmem [shape: f32[1,512], index: 2, kind: input, shape index: {}]
  %s3 = inlined_call_operand.vmem [shape: bf16[512,256], index: 3, kind: input, shape index: {}]
  %s4 = inlined_call_operand.vmem [shape: f32[1,256], index: 4, kind: input, shape index: {}]
  %s5 = inlined_call_operand.vmem [shape: bf16[256,128], index: 5, kind: input, shape index: {}]
  %s6 = inlined_call_operand.vmem [shape: f32[1,128], index: 6, kind: input, shape index: {}]
  %s7 = inlined_call_operand.vmem [shape: f32[32,128], index: 7, kind: output, shape index: {}]
  %s8 = sld [smem:[#allocation0]]
  $region38: #{generator_forward.1} parent=0
    _
  %s10 = ssub.s32 1, %s8
  %s11 = scalar_select 0, %s10, %s8
  // Predicated region
  $region2: #{generator_forward.1} parent=0 // pred_check
    _
  $region3: #{generator_forward.1} parent=0 // pred_check_branch
    %13 = sbr.rel (0) target = $region5
  $region4: #{generator_forward.1} parent=0 // pred_region
    _
  $region5: #{generator_forward.1} parent=0 // pred_fallthru
    _
  // Predicated region
  $region6: #{generator_forward.1} parent=0 // pred_check
    _
  $region7: #{generator_forward.1} parent=0 // pred_check_branch
    %15 = sbr.rel (0) target = $region9
  $region8: #{generator_forward.1} parent=0 // pred_region
    _
  $region9: #{generator_forward.1} parent=0 // pred_fallthru
    _
  // Predicated region
  $region10: #{generator_forward.1} parent=0 // pred_check
    _
  $region11: #{generator_forward.1} parent=0 // pred_check_branch
    %17 = sbr.rel (0) target = $region13
  $region12: #{generator_forward.1} parent=0 // pred_region
    _
  $region13: #{generator_forward.1} parent=0 // pred_fallthru
    _
  // Predicated region
  $region14: #{generator_forward.1} parent=0 // pred_check
    _
  $region15: #{generator_forward.1} parent=0 // pred_check_branch
    %19 = sbr.rel (0) target = $region17
  $region16: #{generator_forward.1} parent=0 // pred_region
    _
  $region17: #{generator_forward.1} parent=0 // pred_fallthru
    _
  // Predicated region
  $region18: #{generator_forward.1} parent=0 // pred_check
    _
  $region19: #{generator_forward.1} parent=0 // pred_check_branch
    %21 = sbr.rel (0) target = $region21
  $region20: #{generator_forward.1} parent=0 // pred_region
    _
  $region21: #{generator_forward.1} parent=0 // pred_fallthru
    _
  // Predicated region
  $region22: #{generator_forward.1} parent=0 // pred_check
    _
  $region23: #{generator_forward.1} parent=0 // pred_check_branch
    %23 = sbr.rel (0) target = $region25
  $region24: #{generator_forward.1} parent=0 // pred_region
    _
  $region25: #{generator_forward.1} parent=0 // pred_fallthru
    _
  // Predicated region
  $region26: #{generator_forward.1} parent=0 // pred_check
    _
  $region27: #{generator_forward.1} parent=0 // pred_check_branch
    %25 = sbr.rel (0) target = $region29
  $region28: #{generator_forward.1} parent=0 // pred_region
    _
  $region29: #{generator_forward.1} parent=0 // pred_fallthru
    _
  %v27 = vld [vmem:[%s0] sm:$0xff]
  %v28 = vld [vmem:[%s0 + $0x8] sm:$0xff]
  %v29 = vld [vmem:[%s0 + $0x10] sm:$0xff]
  %v30 = vld [vmem:[%s0 + $0x18] sm:$0xff]
  %v31 = vld [vmem:[%s1] sm:$0x77]
  %v32 = vld [vmem:[%s1 + $0x8] sm:$0x77]
  %34 = vset.pattern.permute.xlu0 0
  %35 = vperm.xlu0 %34, %v27
  %v36 = vpop.permute.xlu0 %35
  %39 = vset.pattern.permute.xlu0 0
  %40 = vperm.xlu0 %39, %v28
  %v41 = vpop.permute.xlu0 %40
  %44 = vset.pattern.permute.xlu0 0
  %45 = vperm.xlu0 %44, %v29
  %v46 = vpop.permute.xlu0 %45
  %49 = vset.pattern.permute.xlu0 0
  %50 = vperm.xlu0 %49, %v30
  %v51 = vpop.permute.xlu0 %50
  %v55 = vlaneseq
  %v56 = vshrl.u32 %v55, 7
  %v57 = vsub.s32 0, %v56
  %v58 = vrot.slane %v31, %v57
  %v59 = vlaneseq
  %v60 = vshrl.u32 %v59, 7
  %v61 = vsub.s32 4, %v60
  %v62 = vrot.slane %v31, %v61
  %v63 = vlaneseq
  %v64 = vshrl.u32 %v63, 7
  %v65 = vsub.s32 0, %v64
  %v66 = vrot.slane %v32, %v65
  %v67 = vlaneseq
  %v68 = vshrl.u32 %v67, 7
  %v69 = vsub.s32 4, %v68
  %v70 = vrot.slane %v32, %v69
  %v75 = vlaneseq
  %v76 = vshrl.u32 %v75, 7
  %v77 = vsub.s32 0, %v76
  %v78 = vrot.slane %v58, %v77
  %v79 = vlaneseq
  %v80 = vshrl.u32 %v79, 7
  %v81 = vsub.s32 0, %v80
  %v82 = vrot.slane %v62, %v81
  %v83 = vlaneseq
  %v84 = vshrl.u32 %v83, 7
  %v85 = vsub.s32 0, %v84
  %v86 = vrot.slane %v66, %v85
  %v87 = vlaneseq
  %v88 = vshrl.u32 %v87, 7
  %v89 = vsub.s32 0, %v88
  %v90 = vrot.slane %v70, %v89
  %v91 = vmul.f32 %v36, %v78
  %v92 = vmul.f32 %v36, %v82
  %v93 = vmul.f32 %v36, %v86
  %v94 = vmul.f32 %v36, %v90
  %v95 = vmul.f32 %v41, %v78
  %v96 = vmul.f32 %v41, %v82
  %v97 = vmul.f32 %v41, %v86
  %v98 = vmul.f32 %v41, %v90
  %v99 = vmul.f32 %v46, %v78
  %v100 = vmul.f32 %v46, %v82
  %v101 = vmul.f32 %v46, %v86
  %v102 = vmul.f32 %v46, %v90
  %v103 = vmul.f32 %v51, %v78
  %v104 = vmul.f32 %v51, %v82
  %v105 = vmul.f32 %v51, %v86
  %v106 = vmul.f32 %v51, %v90
  %107 = vset.pattern.permute.xlu0 1
  %108 = vperm.xlu0 %107, %v27
  %v109 = vpop.permute.xlu0 %108
  %111 = vset.pattern.permute.xlu0 1
  %112 = vperm.xlu0 %111, %v28
  %v113 = vpop.permute.xlu0 %112
  %115 = vset.pattern.permute.xlu0 1
  %116 = vperm.xlu0 %115, %v29
  %v117 = vpop.permute.xlu0 %116
  %119 = vset.pattern.permute.xlu0 1
  %120 = vperm.xlu0 %119, %v30
  %v121 = vpop.permute.xlu0 %120
  %v123 = vlaneseq
  %v124 = vshrl.u32 %v123, 7
  %v125 = vsub.s32 1, %v124
  %v126 = vrot.slane %v31, %v125
  %v127 = vlaneseq
  %v128 = vshrl.u32 %v127, 7
  %v129 = vsub.s32 5, %v128
  %v130 = vrot.slane %v31, %v129
  %v131 = vlaneseq
  %v132 = vshrl.u32 %v131, 7
  %v133 = vsub.s32 1, %v132
  %v134 = vrot.slane %v32, %v133
  %v135 = vlaneseq
  %v136 = vshrl.u32 %v135, 7
  %v137 = vsub.s32 5, %v136
  %v138 = vrot.slane %v32, %v137
  %v143 = vlaneseq
  %v144 = vshrl.u32 %v143, 7
  %v145 = vsub.s32 1, %v144
  %v146 = vrot.slane %v126, %v145
  %v147 = vlaneseq
  %v148 = vshrl.u32 %v147, 7
  %v149 = vsub.s32 1, %v148
  %v150 = vrot.slane %v130, %v149
  %v151 = vlaneseq
  %v152 = vshrl.u32 %v151, 7
  %v153 = vsub.s32 1, %v152
  %v154 = vrot.slane %v134, %v153
  %v155 = vlaneseq
  %v156 = vshrl.u32 %v155, 7
  %v157 = vsub.s32 1, %v156
  %v158 = vrot.slane %v138, %v157
  %v159 = vmul.f32 %v109, %v146
  %v160 = vmul.f32 %v109, %v150
  %v161 = vmul.f32 %v109, %v154
  %v162 = vmul.f32 %v109, %v158
  %v163 = vmul.f32 %v113, %v146
  %v164 = vmul.f32 %v113, %v150
  %v165 = vmul.f32 %v113, %v154
  %v166 = vmul.f32 %v113, %v158
  %v167 = vmul.f32 %v117, %v146
  %v168 = vmul.f32 %v117, %v150
  %v169 = vmul.f32 %v117, %v154
  %v170 = vmul.f32 %v117, %v158
  %v171 = vmul.f32 %v121, %v146
  %v172 = vmul.f32 %v121, %v150
  %v173 = vmul.f32 %v121, %v154
  %v174 = vmul.f32 %v121, %v158
  %v175 = vadd.f32 %v91, %v159
  %v176 = vadd.f32 %v92, %v160
  %v177 = vadd.f32 %v93, %v161
  %v178 = vadd.f32 %v94, %v162
  %v179 = vadd.f32 %v95, %v163
  %v180 = vadd.f32 %v96, %v164
  %v181 = vadd.f32 %v97, %v165
  %v182 = vadd.f32 %v98, %v166
  %v183 = vadd.f32 %v99, %v167
  %v184 = vadd.f32 %v100, %v168
  %v185 = vadd.f32 %v101, %v169
  %v186 = vadd.f32 %v102, %v170
  %v187 = vadd.f32 %v103, %v171
  %v188 = vadd.f32 %v104, %v172
  %v189 = vadd.f32 %v105, %v173
  %v190 = vadd.f32 %v106, %v174
  %191 = vset.pattern.permute.xlu0 2
  %192 = vperm.xlu0 %191, %v27
  %v193 = vpop.permute.xlu0 %192
  %195 = vset.pattern.permute.xlu0 2
  %196 = vperm.xlu0 %195, %v28
  %v197 = vpop.permute.xlu0 %196
  %199 = vset.pattern.permute.xlu0 2
  %200 = vperm.xlu0 %199, %v29
  %v201 = vpop.permute.xlu0 %200
  %203 = vset.pattern.permute.xlu0 2
  %204 = vperm.xlu0 %203, %v30
  %v205 = vpop.permute.xlu0 %204
  %v207 = vlaneseq
  %v208 = vshrl.u32 %v207, 7
  %v209 = vsub.s32 2, %v208
  %v210 = vrot.slane %v31, %v209
  %v211 = vlaneseq
  %v212 = vshrl.u32 %v211, 7
  %v213 = vsub.s32 6, %v212
  %v214 = vrot.slane %v31, %v213
  %v215 = vlaneseq
  %v216 = vshrl.u32 %v215, 7
  %v217 = vsub.s32 2, %v216
  %v218 = vrot.slane %v32, %v217
  %v219 = vlaneseq
  %v220 = vshrl.u32 %v219, 7
  %v221 = vsub.s32 6, %v220
  %v222 = vrot.slane %v32, %v221
  %v227 = vlaneseq
  %v228 = vshrl.u32 %v227, 7
  %v229 = vsub.s32 2, %v228
  %v230 = vrot.slane %v210, %v229
  %v231 = vlaneseq
  %v232 = vshrl.u32 %v231, 7
  %v233 = vsub.s32 2, %v232
  %v234 = vrot.slane %v214, %v233
  %v235 = vlaneseq
  %v236 = vshrl.u32 %v235, 7
  %v237 = vsub.s32 2, %v236
  %v238 = vrot.slane %v218, %v237
  %v239 = vlaneseq
  %v240 = vshrl.u32 %v239, 7
  %v241 = vsub.s32 2, %v240
  %v242 = vrot.slane %v222, %v241
  %v243 = vmul.f32 %v193, %v230
  %v244 = vmul.f32 %v193, %v234
  %v245 = vmul.f32 %v193, %v238
  %v246 = vmul.f32 %v193, %v242
  %v247 = vmul.f32 %v197, %v230
  %v248 = vmul.f32 %v197, %v234
  %v249 = vmul.f32 %v197, %v238
  %v250 = vmul.f32 %v197, %v242
  %v251 = vmul.f32 %v201, %v230
  %v252 = vmul.f32 %v201, %v234
  %v253 = vmul.f32 %v201, %v238
  %v254 = vmul.f32 %v201, %v242
  %v255 = vmul.f32 %v205, %v230
  %v256 = vmul.f32 %v205, %v234
  %v257 = vmul.f32 %v205, %v238
  %v258 = vmul.f32 %v205, %v242
  %v259 = vadd.f32 %v175, %v243
  %v260 = vadd.f32 %v176, %v244
  %v261 = vadd.f32 %v177, %v245
  %v262 = vadd.f32 %v178, %v246
  %v263 = vadd.f32 %v179, %v247
  %v264 = vadd.f32 %v180, %v248
  %v265 = vadd.f32 %v181, %v249
  %v266 = vadd.f32 %v182, %v250
  %v267 = vadd.f32 %v183, %v251
  %v268 = vadd.f32 %v184, %v252
  %v269 = vadd.f32 %v185, %v253
  %v270 = vadd.f32 %v186, %v254
  %v271 = vadd.f32 %v187, %v255
  %v272 = vadd.f32 %v188, %v256
  %v273 = vadd.f32 %v189, %v257
  %v274 = vadd.f32 %v190, %v258
  %v275 = vld [vmem:[%s2] sm:$0xf]
  %v277 = vlaneseq
  %v278 = vshrl.u32 %v277, 7
  %v279 = vsub.s32 0, %v278
  %v280 = vrot.slane %v275, %v279
  %v281 = vlaneseq
  %v282 = vshrl.u32 %v281, 7
  %v283 = vsub.s32 1, %v282
  %v284 = vrot.slane %v275, %v283
  %v285 = vlaneseq
  %v286 = vshrl.u32 %v285, 7
  %v287 = vsub.s32 2, %v286
  %v288 = vrot.slane %v275, %v287
  %v289 = vlaneseq
  %v290 = vshrl.u32 %v289, 7
  %v291 = vsub.s32 3, %v290
  %v292 = vrot.slane %v275, %v291
  %v297 = vadd.f32 %v259, %v280
  %v298 = vadd.f32 %v260, %v284
  %v299 = vadd.f32 %v261, %v288
  %v300 = vadd.f32 %v262, %v292
  %v301 = vadd.f32 %v263, %v280
  %v302 = vadd.f32 %v264, %v284
  %v303 = vadd.f32 %v265, %v288
  %v304 = vadd.f32 %v266, %v292
  %v305 = vadd.f32 %v267, %v280
  %v306 = vadd.f32 %v268, %v284
  %v307 = vadd.f32 %v269, %v288
  %v308 = vadd.f32 %v270, %v292
  %v309 = vadd.f32 %v271, %v280
  %v310 = vadd.f32 %v272, %v284
  %v311 = vadd.f32 %v273, %v288
  %v312 = vadd.f32 %v274, %v292
  %v313 = vmax.f32 %v297, 0.0
  %v314 = vmax.f32 %v298, 0.0
  %v315 = vmax.f32 %v299, 0.0
  %v316 = vmax.f32 %v300, 0.0
  %v317 = vmax.f32 %v301, 0.0
  %v318 = vmax.f32 %v302, 0.0
  %v319 = vmax.f32 %v303, 0.0
  %v320 = vmax.f32 %v304, 0.0
  %v321 = vmax.f32 %v305, 0.0
  %v322 = vmax.f32 %v306, 0.0
  %v323 = vmax.f32 %v307, 0.0
  %v324 = vmax.f32 %v308, 0.0
  %v325 = vmax.f32 %v309, 0.0
  %v326 = vmax.f32 %v310, 0.0
  %v327 = vmax.f32 %v311, 0.0
  %v328 = vmax.f32 %v312, 0.0
  %v329 = vpack.c.bf16 %v317, %v313
  %v330 = vpack.c.bf16 %v318, %v314
  %v331 = vpack.c.bf16 %v319, %v315
  %v332 = vpack.c.bf16 %v320, %v316
  %v333 = vpack.c.bf16 %v325, %v321
  %v334 = vpack.c.bf16 %v326, %v322
  %v335 = vpack.c.bf16 %v327, %v323
  %v336 = vpack.c.bf16 %v328, %v324
  %v337 = vld [vmem:[%s3] sm:$0xff]
  %v338 = vld [vmem:[%s3 + $0x8] sm:$0xff]
  %v339 = vld [vmem:[%s3 + $0x10] sm:$0xff]
  %v340 = vld [vmem:[%s3 + $0x18] sm:$0xff]
  %v341 = vld [vmem:[%s3 + $0x20] sm:$0xff]
  %v342 = vld [vmem:[%s3 + $0x28] sm:$0xff]
  %v343 = vld [vmem:[%s3 + $0x30] sm:$0xff]
  %v344 = vld [vmem:[%s3 + $0x38] sm:$0xff]
  %v345 = vld [vmem:[%s3 + $0x40] sm:$0xff]
  %v346 = vld [vmem:[%s3 + $0x48] sm:$0xff]
  %v347 = vld [vmem:[%s3 + $0x50] sm:$0xff]
  %v348 = vld [vmem:[%s3 + $0x58] sm:$0xff]
  %v349 = vld [vmem:[%s3 + $0x60] sm:$0xff]
  %v350 = vld [vmem:[%s3 + $0x68] sm:$0xff]
  %v351 = vld [vmem:[%s3 + $0x70] sm:$0xff]
  %v352 = vld [vmem:[%s3 + $0x78] sm:$0xff]
  %v353 = vld [vmem:[%s3 + $0x80] sm:$0xff]
  %v354 = vld [vmem:[%s3 + $0x88] sm:$0xff]
  %v355 = vld [vmem:[%s3 + $0x90] sm:$0xff]
  %v356 = vld [vmem:[%s3 + $0x98] sm:$0xff]
  %v357 = vld [vmem:[%s3 + $0xa0] sm:$0xff]
  %v358 = vld [vmem:[%s3 + $0xa8] sm:$0xff]
  %v359 = vld [vmem:[%s3 + $0xb0] sm:$0xff]
  %v360 = vld [vmem:[%s3 + $0xb8] sm:$0xff]
  %v361 = vld [vmem:[%s3 + $0xc0] sm:$0xff]
  %v362 = vld [vmem:[%s3 + $0xc8] sm:$0xff]
  %v363 = vld [vmem:[%s3 + $0xd0] sm:$0xff]
  %v364 = vld [vmem:[%s3 + $0xd8] sm:$0xff]
  %v365 = vld [vmem:[%s3 + $0xe0] sm:$0xff]
  %v366 = vld [vmem:[%s3 + $0xe8] sm:$0xff]
  %v367 = vld [vmem:[%s3 + $0xf0] sm:$0xff]
  %v368 = vld [vmem:[%s3 + $0xf8] sm:$0xff]
  %v369 = vld [vmem:[%s3 + $0x100] sm:$0xff]
  %v370 = vld [vmem:[%s3 + $0x108] sm:$0xff]
  %v371 = vld [vmem:[%s3 + $0x110] sm:$0xff]
  %v372 = vld [vmem:[%s3 + $0x118] sm:$0xff]
  %v373 = vld [vmem:[%s3 + $0x120] sm:$0xff]
  %v374 = vld [vmem:[%s3 + $0x128] sm:$0xff]
  %v375 = vld [vmem:[%s3 + $0x130] sm:$0xff]
  %v376 = vld [vmem:[%s3 + $0x138] sm:$0xff]
  %v377 = vld [vmem:[%s3 + $0x140] sm:$0xff]
  %v378 = vld [vmem:[%s3 + $0x148] sm:$0xff]
  %v379 = vld [vmem:[%s3 + $0x150] sm:$0xff]
  %v380 = vld [vmem:[%s3 + $0x158] sm:$0xff]
  %v381 = vld [vmem:[%s3 + $0x160] sm:$0xff]
  %v382 = vld [vmem:[%s3 + $0x168] sm:$0xff]
  %v383 = vld [vmem:[%s3 + $0x170] sm:$0xff]
  %v384 = vld [vmem:[%s3 + $0x178] sm:$0xff]
  %v385 = vld [vmem:[%s3 + $0x180] sm:$0xff]
  %v386 = vld [vmem:[%s3 + $0x188] sm:$0xff]
  %v387 = vld [vmem:[%s3 + $0x190] sm:$0xff]
  %v388 = vld [vmem:[%s3 + $0x198] sm:$0xff]
  %v389 = vld [vmem:[%s3 + $0x1a0] sm:$0xff]
  %v390 = vld [vmem:[%s3 + $0x1a8] sm:$0xff]
  %v391 = vld [vmem:[%s3 + $0x1b0] sm:$0xff]
  %v392 = vld [vmem:[%s3 + $0x1b8] sm:$0xff]
  %v393 = vld [vmem:[%s3 + $0x1c0] sm:$0xff]
  %v394 = vld [vmem:[%s3 + $0x1c8] sm:$0xff]
  %v395 = vld [vmem:[%s3 + $0x1d0] sm:$0xff]
  %v396 = vld [vmem:[%s3 + $0x1d8] sm:$0xff]
  %v397 = vld [vmem:[%s3 + $0x1e0] sm:$0xff]
  %v398 = vld [vmem:[%s3 + $0x1e8] sm:$0xff]
  %v399 = vld [vmem:[%s3 + $0x1f0] sm:$0xff]
  %v400 = vld [vmem:[%s3 + $0x1f8] sm:$0xff]
  %v401 = vld [vmem:[%s4] sm:$0x3]
  %v403 = vlaneseq
  %v404 = vshrl.u32 %v403, 7
  %v405 = vsub.s32 0, %v404
  %v406 = vrot.slane %v401, %v405
  %v407 = vlaneseq
  %v408 = vshrl.u32 %v407, 7
  %v409 = vsub.s32 1, %v408
  %v410 = vrot.slane %v401, %v409
  %v477 = vunpack.c.l.b16 %v337
  %v478 = vunpack.c.h.b16 %v337
  %v479 = vunpack.c.l.b16 %v338
  %v480 = vunpack.c.h.b16 %v338
  %v481 = vunpack.c.l.b16 %v339
  %v482 = vunpack.c.h.b16 %v339
  %v483 = vunpack.c.l.b16 %v340
  %v484 = vunpack.c.h.b16 %v340
  %v485 = vunpack.c.l.b16 %v341
  %v486 = vunpack.c.h.b16 %v341
  %v487 = vunpack.c.l.b16 %v342
  %v488 = vunpack.c.h.b16 %v342
  %v489 = vunpack.c.l.b16 %v343
  %v490 = vunpack.c.h.b16 %v343
  %v491 = vunpack.c.l.b16 %v344
  %v492 = vunpack.c.h.b16 %v344
  %v493 = vunpack.c.l.b16 %v345
  %v494 = vunpack.c.h.b16 %v345
  %v495 = vunpack.c.l.b16 %v346
  %v496 = vunpack.c.h.b16 %v346
  %v497 = vunpack.c.l.b16 %v347
  %v498 = vunpack.c.h.b16 %v347
  %v499 = vunpack.c.l.b16 %v348
  %v500 = vunpack.c.h.b16 %v348
  %v501 = vunpack.c.l.b16 %v349
  %v502 = vunpack.c.h.b16 %v349
  %v503 = vunpack.c.l.b16 %v350
  %v504 = vunpack.c.h.b16 %v350
  %v505 = vunpack.c.l.b16 %v351
  %v506 = vunpack.c.h.b16 %v351
  %v507 = vunpack.c.l.b16 %v352
  %v508 = vunpack.c.h.b16 %v352
  %v509 = vunpack.c.l.b16 %v353
  %v510 = vunpack.c.h.b16 %v353
  %v511 = vunpack.c.l.b16 %v354
  %v512 = vunpack.c.h.b16 %v354
  %v513 = vunpack.c.l.b16 %v355
  %v514 = vunpack.c.h.b16 %v355
  %v515 = vunpack.c.l.b16 %v356
  %v516 = vunpack.c.h.b16 %v356
  %v517 = vunpack.c.l.b16 %v357
  %v518 = vunpack.c.h.b16 %v357
  %v519 = vunpack.c.l.b16 %v358
  %v520 = vunpack.c.h.b16 %v358
  %v521 = vunpack.c.l.b16 %v359
  %v522 = vunpack.c.h.b16 %v359
  %v523 = vunpack.c.l.b16 %v360
  %v524 = vunpack.c.h.b16 %v360
  %v525 = vunpack.c.l.b16 %v361
  %v526 = vunpack.c.h.b16 %v361
  %v527 = vunpack.c.l.b16 %v362
  %v528 = vunpack.c.h.b16 %v362
  %v529 = vunpack.c.l.b16 %v363
  %v530 = vunpack.c.h.b16 %v363
  %v531 = vunpack.c.l.b16 %v364
  %v532 = vunpack.c.h.b16 %v364
  %v533 = vunpack.c.l.b16 %v365
  %v534 = vunpack.c.h.b16 %v365
  %v535 = vunpack.c.l.b16 %v366
  %v536 = vunpack.c.h.b16 %v366
  %v537 = vunpack.c.l.b16 %v367
  %v538 = vunpack.c.h.b16 %v367
  %v539 = vunpack.c.l.b16 %v368
  %v540 = vunpack.c.h.b16 %v368
  %v541 = vunpack.c.l.b16 %v369
  %v542 = vunpack.c.h.b16 %v369
  %v543 = vunpack.c.l.b16 %v370
  %v544 = vunpack.c.h.b16 %v370
  %v545 = vunpack.c.l.b16 %v371
  %v546 = vunpack.c.h.b16 %v371
  %v547 = vunpack.c.l.b16 %v372
  %v548 = vunpack.c.h.b16 %v372
  %v549 = vunpack.c.l.b16 %v373
  %v550 = vunpack.c.h.b16 %v373
  %v551 = vunpack.c.l.b16 %v374
  %v552 = vunpack.c.h.b16 %v374
  %v553 = vunpack.c.l.b16 %v375
  %v554 = vunpack.c.h.b16 %v375
  %v555 = vunpack.c.l.b16 %v376
  %v556 = vunpack.c.h.b16 %v376
  %v557 = vunpack.c.l.b16 %v377
  %v558 = vunpack.c.h.b16 %v377
  %v559 = vunpack.c.l.b16 %v378
  %v560 = vunpack.c.h.b16 %v378
  %v561 = vunpack.c.l.b16 %v379
  %v562 = vunpack.c.h.b16 %v379
  %v563 = vunpack.c.l.b16 %v380
  %v564 = vunpack.c.h.b16 %v380
  %v565 = vunpack.c.l.b16 %v381
  %v566 = vunpack.c.h.b16 %v381
  %v567 = vunpack.c.l.b16 %v382
  %v568 = vunpack.c.h.b16 %v382
  %v569 = vunpack.c.l.b16 %v383
  %v570 = vunpack.c.h.b16 %v383
  %v571 = vunpack.c.l.b16 %v384
  %v572 = vunpack.c.h.b16 %v384
  %v573 = vunpack.c.l.b16 %v385
  %v574 = vunpack.c.h.b16 %v385
  %v575 = vunpack.c.l.b16 %v386
  %v576 = vunpack.c.h.b16 %v386
  %v577 = vunpack.c.l.b16 %v387
  %v578 = vunpack.c.h.b16 %v387
  %v579 = vunpack.c.l.b16 %v388
  %v580 = vunpack.c.h.b16 %v388
  %v581 = vunpack.c.l.b16 %v389
  %v582 = vunpack.c.h.b16 %v389
  %v583 = vunpack.c.l.b16 %v390
  %v584 = vunpack.c.h.b16 %v390
  %v585 = vunpack.c.l.b16 %v391
  %v586 = vunpack.c.h.b16 %v391
  %v587 = vunpack.c.l.b16 %v392
  %v588 = vunpack.c.h.b16 %v392
  %v589 = vunpack.c.l.b16 %v393
  %v590 = vunpack.c.h.b16 %v393
  %v591 = vunpack.c.l.b16 %v394
  %v592 = vunpack.c.h.b16 %v394
  %v593 = vunpack.c.l.b16 %v395
  %v594 = vunpack.c.h.b16 %v395
  %v595 = vunpack.c.l.b16 %v396
  %v596 = vunpack.c.h.b16 %v396
  %v597 = vunpack.c.l.b16 %v397
  %v598 = vunpack.c.h.b16 %v397
  %v599 = vunpack.c.l.b16 %v398
  %v600 = vunpack.c.h.b16 %v398
  %v601 = vunpack.c.l.b16 %v399
  %v602 = vunpack.c.h.b16 %v399
  %v603 = vunpack.c.l.b16 %v400
  %v604 = vunpack.c.h.b16 %v400
  %v605 = vpack.c.b16 %v479, %v477
  %v606 = vpack.c.b16 %v480, %v478
  %v607 = vpack.c.b16 %v483, %v481
  %v608 = vpack.c.b16 %v484, %v482
  %v609 = vpack.c.b16 %v487, %v485
  %v610 = vpack.c.b16 %v488, %v486
  %v611 = vpack.c.b16 %v491, %v489
  %v612 = vpack.c.b16 %v492, %v490
  %v613 = vpack.c.b16 %v495, %v493
  %v614 = vpack.c.b16 %v496, %v494
  %v615 = vpack.c.b16 %v499, %v497
  %v616 = vpack.c.b16 %v500, %v498
  %v617 = vpack.c.b16 %v503, %v501
  %v618 = vpack.c.b16 %v504, %v502
  %v619 = vpack.c.b16 %v507, %v505
  %v620 = vpack.c.b16 %v508, %v506
  %v621 = vpack.c.b16 %v511, %v509
  %v622 = vpack.c.b16 %v512, %v510
  %v623 = vpack.c.b16 %v515, %v513
  %v624 = vpack.c.b16 %v516, %v514
  %v625 = vpack.c.b16 %v519, %v517
  %v626 = vpack.c.b16 %v520, %v518
  %v627 = vpack.c.b16 %v523, %v521
  %v628 = vpack.c.b16 %v524, %v522
  %v629 = vpack.c.b16 %v527, %v525
  %v630 = vpack.c.b16 %v528, %v526
  %v631 = vpack.c.b16 %v531, %v529
  %v632 = vpack.c.b16 %v532, %v530
  %v633 = vpack.c.b16 %v535, %v533
  %v634 = vpack.c.b16 %v536, %v534
  %v635 = vpack.c.b16 %v539, %v537
  %v636 = vpack.c.b16 %v540, %v538
  %v637 = vpack.c.b16 %v543, %v541
  %v638 = vpack.c.b16 %v544, %v542
  %v639 = vpack.c.b16 %v547, %v545
  %v640 = vpack.c.b16 %v548, %v546
  %v641 = vpack.c.b16 %v551, %v549
  %v642 = vpack.c.b16 %v552, %v550
  %v643 = vpack.c.b16 %v555, %v553
  %v644 = vpack.c.b16 %v556, %v554
  %v645 = vpack.c.b16 %v559, %v557
  %v646 = vpack.c.b16 %v560, %v558
  %v647 = vpack.c.b16 %v563, %v561
  %v648 = vpack.c.b16 %v564, %v562
  %v649 = vpack.c.b16 %v567, %v565
  %v650 = vpack.c.b16 %v568, %v566
  %v651 = vpack.c.b16 %v571, %v569
  %v652 = vpack.c.b16 %v572, %v570
  %v653 = vpack.c.b16 %v575, %v573
  %v654 = vpack.c.b16 %v576, %v574
  %v655 = vpack.c.b16 %v579, %v577
  %v656 = vpack.c.b16 %v580, %v578
  %v657 = vpack.c.b16 %v583, %v581
  %v658 = vpack.c.b16 %v584, %v582
  %v659 = vpack.c.b16 %v587, %v585
  %v660 = vpack.c.b16 %v588, %v586
  %v661 = vpack.c.b16 %v591, %v589
  %v662 = vpack.c.b16 %v592, %v590
  %v663 = vpack.c.b16 %v595, %v593
  %v664 = vpack.c.b16 %v596, %v594
  %v665 = vpack.c.b16 %v599, %v597
  %v666 = vpack.c.b16 %v600, %v598
  %v667 = vpack.c.b16 %v603, %v601
  %v668 = vpack.c.b16 %v604, %v602
  %733 = vmatprep.subr.bf16.mxu0 %v606
  %734 = vmatpush1.bf16.msra.mxu0 %v605
  %735 = vmatprep.subr.bf16.mxu0 %v608
  %736 = vmatpush1.bf16.msra.mxu0 %v607
  %737 = vmatprep.subr.bf16.mxu0 %v610
  %738 = vmatpush1.bf16.msra.mxu0 %v609
  %739 = vmatprep.subr.bf16.mxu0 %v612
  %740 = vmatpush1.bf16.msra.mxu0 %v611
  %741 = vmatprep.subr.bf16.mxu0 %v614
  %742 = vmatpush1.bf16.msra.mxu0 %v613
  %743 = vmatprep.subr.bf16.mxu0 %v616
  %744 = vmatpush1.bf16.msra.mxu0 %v615
  %745 = vmatprep.subr.bf16.mxu0 %v618
  %746 = vmatpush1.bf16.msra.mxu0 %v617
  %747 = vmatprep.subr.bf16.mxu0 %v620
  %748 = vmatpush1.bf16.msra.mxu0 %v619
  %749 = vmatprep.subr.bf16.mxu0 %v622
  %750 = vmatpush1.bf16.msra.mxu0 %v621
  %751 = vmatprep.subr.bf16.mxu0 %v624
  %752 = vmatpush1.bf16.msra.mxu0 %v623
  %753 = vmatprep.subr.bf16.mxu0 %v626
  %754 = vmatpush1.bf16.msra.mxu0 %v625
  %755 = vmatprep.subr.bf16.mxu0 %v628
  %756 = vmatpush1.bf16.msra.mxu0 %v627
  %757 = vmatprep.subr.bf16.mxu0 %v630
  %758 = vmatpush1.bf16.msra.mxu0 %v629
  %759 = vmatprep.subr.bf16.mxu0 %v632
  %760 = vmatpush1.bf16.msra.mxu0 %v631
  %761 = vmatprep.subr.bf16.mxu0 %v634
  %762 = vmatpush1.bf16.msra.mxu0 %v633
  %763 = vmatprep.subr.bf16.mxu0 %v636
  %764 = vmatpush1.bf16.msra.mxu0 %v635
  %765 = vmatprep.mubr.bf16.mxu0 %v330
  %766 = vmatmul.mubr.bf16.gmra.mrb[0].mxu0 %v329
  %v767 = vpop.f32.mrb[0].mxu0
  %v768 = vadd.f32 %v406, %v767
  %v769 = vpop.f32.mrb[0].mxu0
  %v770 = vadd.f32 %v410, %v769
  %v771 = vpop.f32.mrb[0].mxu0
  %v772 = vadd.f32 %v406, %v771
  %v773 = vpop.f32.mrb[0].mxu0
  %v774 = vadd.f32 %v410, %v773
  %775 = vmatprep.mubr.bf16.mxu0 %v334
  %776 = vmatmul.mubr.bf16.gmra.mrb[0].mxu0 %v333
  %v777 = vpop.f32.mrb[0].mxu0
  %v778 = vadd.f32 %v406, %v777
  %v779 = vpop.f32.mrb[0].mxu0
  %v780 = vadd.f32 %v410, %v779
  %v781 = vpop.f32.mrb[0].mxu0
  %v782 = vadd.f32 %v406, %v781
  %v783 = vpop.f32.mrb[0].mxu0
  %v784 = vadd.f32 %v410, %v783
  %785 = vdwg.mxu0
  %786 = vmatprep.subr.bf16.mxu0 %v638
  %787 = vmatpush1.bf16.msra.mxu0 %v637
  %788 = vmatprep.subr.bf16.mxu0 %v640
  %789 = vmatpush1.bf16.msra.mxu0 %v639
  %790 = vmatprep.subr.bf16.mxu0 %v642
  %791 = vmatpush1.bf16.msra.mxu0 %v641
  %792 = vmatprep.subr.bf16.mxu0 %v644
  %793 = vmatpush1.bf16.msra.mxu0 %v643
  %794 = vmatprep.subr.bf16.mxu0 %v646
  %795 = vmatpush1.bf16.msra.mxu0 %v645
  %796 = vmatprep.subr.bf16.mxu0 %v648
  %797 = vmatpush1.bf16.msra.mxu0 %v647
  %798 = vmatprep.subr.bf16.mxu0 %v650
  %799 = vmatpush1.bf16.msra.mxu0 %v649
  %800 = vmatprep.subr.bf16.mxu0 %v652
  %801 = vmatpush1.bf16.msra.mxu0 %v651
  %802 = vmatprep.subr.bf16.mxu0 %v654
  %803 = vmatpush1.bf16.msra.mxu0 %v653
  %804 = vmatprep.subr.bf16.mxu0 %v656
  %805 = vmatpush1.bf16.msra.mxu0 %v655
  %806 = vmatprep.subr.bf16.mxu0 %v658
  %807 = vmatpush1.bf16.msra.mxu0 %v657
  %808 = vmatprep.subr.bf16.mxu0 %v660
  %809 = vmatpush1.bf16.msra.mxu0 %v659
  %810 = vmatprep.subr.bf16.mxu0 %v662
  %811 = vmatpush1.bf16.msra.mxu0 %v661
  %812 = vmatprep.subr.bf16.mxu0 %v664
  %813 = vmatpush1.bf16.msra.mxu0 %v663
  %814 = vmatprep.subr.bf16.mxu0 %v666
  %815 = vmatpush1.bf16.msra.mxu0 %v665
  %816 = vmatprep.subr.bf16.mxu0 %v668
  %817 = vmatpush1.bf16.msra.mxu0 %v667
  %818 = vmatprep.mubr.bf16.mxu0 %v332
  %819 = vmatmul.mubr.bf16.gmra.mrb[0].mxu0 %v331
  %v820 = vpop.f32.mrb[0].mxu0
  %v821 = vadd.f32 %v768, %v820
  %v822 = vpop.f32.mrb[0].mxu0
  %v823 = vadd.f32 %v770, %v822
  %v824 = vpop.f32.mrb[0].mxu0
  %v825 = vadd.f32 %v772, %v824
  %v826 = vpop.f32.mrb[0].mxu0
  %v827 = vadd.f32 %v774, %v826
  %828 = vmatprep.mubr.bf16.mxu0 %v336
  %829 = vmatmul.mubr.bf16.gmra.mrb[0].mxu0 %v335
  %v830 = vpop.f32.mrb[0].mxu0
  %v831 = vadd.f32 %v778, %v830
  %v832 = vpop.f32.mrb[0].mxu0
  %v833 = vadd.f32 %v780, %v832
  %v834 = vpop.f32.mrb[0].mxu0
  %v835 = vadd.f32 %v782, %v834
  %v836 = vpop.f32.mrb[0].mxu0
  %v837 = vadd.f32 %v784, %v836
  %838 = vdwg.mxu0
  %v839 = vmax.f32 %v821, 0.0
  %v840 = vmax.f32 %v823, 0.0
  %v841 = vmax.f32 %v825, 0.0
  %v842 = vmax.f32 %v827, 0.0
  %v843 = vmax.f32 %v831, 0.0
  %v844 = vmax.f32 %v833, 0.0
  %v845 = vmax.f32 %v835, 0.0
  %v846 = vmax.f32 %v837, 0.0
  %v847 = vpack.c.bf16 %v841, %v839
  %v848 = vpack.c.bf16 %v842, %v840
  %v849 = vpack.c.bf16 %v845, %v843
  %v850 = vpack.c.bf16 %v846, %v844
  %v851 = vld [vmem:[%s5] sm:$0xf]
  %v852 = vld [vmem:[%s5 + $0x4] sm:$0xf]
  %v853 = vld [vmem:[%s5 + $0x8] sm:$0xf]
  %v854 = vld [vmem:[%s5 + $0xc] sm:$0xf]
  %v855 = vld [vmem:[%s5 + $0x10] sm:$0xf]
  %v856 = vld [vmem:[%s5 + $0x14] sm:$0xf]
  %v857 = vld [vmem:[%s5 + $0x18] sm:$0xf]
  %v858 = vld [vmem:[%s5 + $0x1c] sm:$0xf]
  %v859 = vld [vmem:[%s5 + $0x20] sm:$0xf]
  %v860 = vld [vmem:[%s5 + $0x24] sm:$0xf]
  %v861 = vld [vmem:[%s5 + $0x28] sm:$0xf]
  %v862 = vld [vmem:[%s5 + $0x2c] sm:$0xf]
  %v863 = vld [vmem:[%s5 + $0x30] sm:$0xf]
  %v864 = vld [vmem:[%s5 + $0x34] sm:$0xf]
  %v865 = vld [vmem:[%s5 + $0x38] sm:$0xf]
  %v866 = vld [vmem:[%s5 + $0x3c] sm:$0xf]
  %v867 = vld [vmem:[%s5 + $0x40] sm:$0xf]
  %v868 = vld [vmem:[%s5 + $0x44] sm:$0xf]
  %v869 = vld [vmem:[%s5 + $0x48] sm:$0xf]
  %v870 = vld [vmem:[%s5 + $0x4c] sm:$0xf]
  %v871 = vld [vmem:[%s5 + $0x50] sm:$0xf]
  %v872 = vld [vmem:[%s5 + $0x54] sm:$0xf]
  %v873 = vld [vmem:[%s5 + $0x58] sm:$0xf]
  %v874 = vld [vmem:[%s5 + $0x5c] sm:$0xf]
  %v875 = vld [vmem:[%s5 + $0x60] sm:$0xf]
  %v876 = vld [vmem:[%s5 + $0x64] sm:$0xf]
  %v877 = vld [vmem:[%s5 + $0x68] sm:$0xf]
  %v878 = vld [vmem:[%s5 + $0x6c] sm:$0xf]
  %v879 = vld [vmem:[%s5 + $0x70] sm:$0xf]
  %v880 = vld [vmem:[%s5 + $0x74] sm:$0xf]
  %v881 = vld [vmem:[%s5 + $0x78] sm:$0xf]
  %v882 = vld [vmem:[%s5 + $0x7c] sm:$0xf]
  %v883 = vld [vmem:[%s6] sm:$0x1]
  %v885 = vlaneseq
  %v886 = vshrl.u32 %v885, 7
  %v887 = vsub.s32 0, %v886
  %v888 = vrot.slane %v883, %v887
  %v922 = vunpack.c.l.b16 %v851
  %v923 = vunpack.c.l.b16 %v852
  %v924 = vunpack.c.l.b16 %v853
  %v925 = vunpack.c.l.b16 %v854
  %v926 = vunpack.c.l.b16 %v855
  %v927 = vunpack.c.l.b16 %v856
  %v928 = vunpack.c.l.b16 %v857
  %v929 = vunpack.c.l.b16 %v858
  %v930 = vunpack.c.l.b16 %v859
  %v931 = vunpack.c.l.b16 %v860
  %v932 = vunpack.c.l.b16 %v861
  %v933 = vunpack.c.l.b16 %v862
  %v934 = vunpack.c.l.b16 %v863
  %v935 = vunpack.c.l.b16 %v864
  %v936 = vunpack.c.l.b16 %v865
  %v937 = vunpack.c.l.b16 %v866
  %v938 = vunpack.c.l.b16 %v867
  %v939 = vunpack.c.l.b16 %v868
  %v940 = vunpack.c.l.b16 %v869
  %v941 = vunpack.c.l.b16 %v870
  %v942 = vunpack.c.l.b16 %v871
  %v943 = vunpack.c.l.b16 %v872
  %v944 = vunpack.c.l.b16 %v873
  %v945 = vunpack.c.l.b16 %v874
  %v946 = vunpack.c.l.b16 %v875
  %v947 = vunpack.c.l.b16 %v876
  %v948 = vunpack.c.l.b16 %v877
  %v949 = vunpack.c.l.b16 %v878
  %v950 = vunpack.c.l.b16 %v879
  %v951 = vunpack.c.l.b16 %v880
  %v952 = vunpack.c.l.b16 %v881
  %v953 = vunpack.c.l.b16 %v882
  %v954 = vpack.c.b16 %v923, %v922
  %v955 = vpack.c.b16 %v925, %v924
  %v956 = vpack.c.b16 %v927, %v926
  %v957 = vpack.c.b16 %v929, %v928
  %v958 = vpack.c.b16 %v931, %v930
  %v959 = vpack.c.b16 %v933, %v932
  %v960 = vpack.c.b16 %v935, %v934
  %v961 = vpack.c.b16 %v937, %v936
  %v962 = vpack.c.b16 %v939, %v938
  %v963 = vpack.c.b16 %v941, %v940
  %v964 = vpack.c.b16 %v943, %v942
  %v965 = vpack.c.b16 %v945, %v944
  %v966 = vpack.c.b16 %v947, %v946
  %v967 = vpack.c.b16 %v949, %v948
  %v968 = vpack.c.b16 %v951, %v950
  %v969 = vpack.c.b16 %v953, %v952
  %986 = vmatprep.subr.bf16.mxu0 0
  %987 = vmatpush1.bf16.msra.mxu0 %v954
  %988 = vmatprep.subr.bf16.mxu0 0
  %989 = vmatpush1.bf16.msra.mxu0 %v955
  %990 = vmatprep.subr.bf16.mxu0 0
  %991 = vmatpush1.bf16.msra.mxu0 %v956
  %992 = vmatprep.subr.bf16.mxu0 0
  %993 = vmatpush1.bf16.msra.mxu0 %v957
  %994 = vmatprep.subr.bf16.mxu0 0
  %995 = vmatpush1.bf16.msra.mxu0 %v958
  %996 = vmatprep.subr.bf16.mxu0 0
  %997 = vmatpush1.bf16.msra.mxu0 %v959
  %998 = vmatprep.subr.bf16.mxu0 0
  %999 = vmatpush1.bf16.msra.mxu0 %v960
  %1000 = vmatprep.subr.bf16.mxu0 0
  %1001 = vmatpush1.bf16.msra.mxu0 %v961
  %1002 = vmatprep.subr.bf16.mxu0 0
  %1003 = vmatpush1.bf16.msra.mxu0 %v962
  %1004 = vmatprep.subr.bf16.mxu0 0
  %1005 = vmatpush1.bf16.msra.mxu0 %v963
  %1006 = vmatprep.subr.bf16.mxu0 0
  %1007 = vmatpush1.bf16.msra.mxu0 %v964
  %1008 = vmatprep.subr.bf16.mxu0 0
  %1009 = vmatpush1.bf16.msra.mxu0 %v965
  %1010 = vmatprep.subr.bf16.mxu0 0
  %1011 = vmatpush1.bf16.msra.mxu0 %v966
  %1012 = vmatprep.subr.bf16.mxu0 0
  %1013 = vmatpush1.bf16.msra.mxu0 %v967
  %1014 = vmatprep.subr.bf16.mxu0 0
  %1015 = vmatpush1.bf16.msra.mxu0 %v968
  %1016 = vmatprep.subr.bf16.mxu0 0
  %1017 = vmatpush1.bf16.msra.mxu0 %v969
  %1018 = vmatprep.mubr.bf16.mxu0 %v848
  %1019 = vmatmul.mubr.bf16.gmra.mrb[0].mxu0 %v847
  %v1020 = vpop.f32.mrb[0].mxu0
  %v1021 = vadd.f32 %v888, %v1020
  %v1022 = vpop.f32.mrb[0].mxu0
  %v1023 = vpop.f32.mrb[0].mxu0
  %v1024 = vadd.f32 %v888, %v1023
  %v1025 = vpop.f32.mrb[0].mxu0
  %1026 = vmatprep.mubr.bf16.mxu0 %v850
  %1027 = vmatmul.mubr.bf16.gmra.mrb[0].mxu0 %v849
  %v1028 = vpop.f32.mrb[0].mxu0
  %v1029 = vadd.f32 %v888, %v1028
  %v1030 = vpop.f32.mrb[0].mxu0
  %v1031 = vpop.f32.mrb[0].mxu0
  %v1032 = vadd.f32 %v888, %v1031
  %v1033 = vpop.f32.mrb[0].mxu0
  %1034 = vdwg.mxu0
  %1035 = vst [vmem:[%s7] sm:$0xff] %v1021
  %1036 = vst [vmem:[%s7 + $0x8] sm:$0xff] %v1024
  %1037 = vst [vmem:[%s7 + $0x10] sm:$0xff] %v1029
  %1038 = vst [vmem:[%s7 + $0x18] sm:$0xff] %v1032
  // Predicated region
  $region30: #{generator_forward.1} parent=0 // pred_check
    _
  $region31: #{generator_forward.1} parent=0 // pred_check_branch
    %1040 = sbr.rel (0) target = $region33
  $region32: #{generator_forward.1} parent=0 // pred_region
    _
  $region33: #{generator_forward.1} parent=0 // pred_fallthru
    _
  // Predicated region
  $region34: #{generator_forward.1} parent=0 // pred_check
    _
  $region35: #{generator_forward.1} parent=0 // pred_check_branch
    %1042 = sbr.rel (0) target = $region37
  $region36: #{generator_forward.1} parent=0 // pred_region
    _
  $region37: #{generator_forward.1} parent=0 // pred_fallthru
    _

</llo_original>
